<compile_context>
chip_gen: v7x
topology: tpu7x:2x2x1
jax: 0.10.0
libtpu: 0.0.40
codegen_flags: <defaults>
</compile_context>

<pallas_src>
import functools

import jax
import jax.numpy as jnp
from jax import lax
from jax.experimental import pallas as pl
from jax.experimental.pallas import tpu as pltpu

_NG = 16  # group axis padded 8 -> 16 (whole bf16 sublane tile); extra columns are zero


def _round_up(x, m):
    return (x + m - 1) // m * m


def _vmem_budget_bytes():
    """~75% of per-core VMEM; generation-aware fallback if get_tpu_info fails."""
    cap = None
    try:
        cap = int(pltpu.get_tpu_info().vmem_capacity_bytes)
    except Exception:
        cap = None
    if not cap:
        kind = ""
        try:
            kind = jax.devices()[0].device_kind.lower()
        except Exception:
            pass
        cap = (64 if "7" in kind else 128) * 1024 * 1024  # v7x: 64 MiB, v5e/v6e: 128 MiB
    return cap * 3 // 4


def _pick_tm(M, dim, in_bytes, out_bytes, budget_bytes):
    """Largest token tile (multiple of 16, <=512) whose working set fits VMEM,
    capped so the 1-D grid has >=2 steps (keeps both v7x TensorCores busy)."""
    c4 = 4 * dim
    # Grid-invariant operands (conservatively assume double-buffering).
    const_bytes = 2 * (dim * c4 + dim * _NG + c4 * _NG + 2 * _NG * c4) * in_bytes \
                  + 2 * c4 * 4
    cap_by_m = max(16, _round_up((M + 1) // 2, 16))
    for cand in (512, 384, 256, 192, 128, 96, 64, 48, 32, 16):
        if cand > cap_by_m:
            continue
        tile_bytes = (2 * cand * dim * in_bytes      # x tile, double-buffered
                      + 2 * cand * c4 * out_bytes    # out tile, double-buffered
                      + 10 * cand * c4)              # f32 y, d + bf16 transients
        if const_bytes + tile_bytes <= budget_bytes:
            return cand
    return 16


def _expand_norm_kernel(x_ref, w_ref, wsum_ref, gsel_ref, gbcast_ref,
                        ggamma_ref, beta_ref, o_ref, *, eps, inv_c, stat_dtype):
    # x_ref:      (tm, dim)     compute dtype (bf16 or f32)
    # w_ref:      (dim, 4*dim)  compute dtype
    # wsum_ref:   (dim, NG)     compute dtype; per-group column sums of w (fold of mean)
    # gsel_ref:   (4*dim, NG)   compute dtype; exact 0/1 group selector (reduce)
    # gbcast_ref: (NG, 4*dim)   compute dtype; exact 0/1 group indicator (broadcast)
    # ggamma_ref: (NG, 4*dim)   compute dtype; 0/1 indicator * tiled gamma (broadcast)
    # beta_ref:   (1, 4*dim)    f32; beta tiled 8x
    # o_ref:      (tm, 4*dim)
    x = x_ref[...]

    # Main expand matmul (MXU, f32 accumulation).
    y = jnp.dot(x, w_ref[...], preferred_element_type=jnp.float32)          # (tm, c4)

    # Group means folded into the weight: K=dim (not 4*dim), independent of y.
    mean_g = jnp.dot(x, wsum_ref[...],
                     preferred_element_type=jnp.float32) * inv_c            # (tm, NG)

    # Broadcast means back to every lane of the group (K=NG, single-pass MXU).
    mean_f = jnp.dot(mean_g.astype(stat_dtype), gbcast_ref[...],
                     preferred_element_type=jnp.float32)                    # (tm, c4)

    # Two-pass variance on the centred residual (no mean^2 cancellation).
    d = y - mean_f
    dc = d.astype(stat_dtype)
    var_g = jnp.dot(dc * dc, gsel_ref[...],
                    preferred_element_type=jnp.float32) * inv_c             # (tm, NG)
    inv_g = lax.rsqrt(var_g + eps)                                          # EUP slot

    # Fused scale broadcast: a_f[m, j] = inv_std[m, g(j)] * gamma[j mod c_out].
    a_f = jnp.dot(inv_g.astype(stat_dtype), ggamma_ref[...],
                  preferred_element_type=jnp.float32)                       # (tm, c4)

    o_ref[...] = (d * a_f + beta_ref[...]).astype(o_ref.dtype)


def patch_expand3d(x, w_expand, gamma, beta, input_resolution, *,
                   eps=1e-5, tm=None, compute_dtype=jnp.bfloat16, out_dtype=None):
    """x: (B, L, dim) with L = Z*H*W.  Returns (B, 8*L, dim//2)."""
    Z, H, W = input_resolution
    B, L, dim = x.shape
    assert L == Z * H * W, (L, Z, H, W)
    assert dim % 2 == 0
    c_out = dim // 2
    c4 = 4 * dim
    out_dtype = x.dtype if out_dtype is None else jnp.dtype(out_dtype)

    M = B * L
    in_b = jnp.dtype(compute_dtype).itemsize
    out_b = jnp.dtype(out_dtype).itemsize
    budget = _vmem_budget_bytes()
    if tm is None:
        tm = _pick_tm(M, dim, in_b, out_b, budget)
    Mp = _round_up(max(M, tm), tm)

    x_flat = x.reshape(M, dim).astype(compute_dtype)
    if Mp != M:
        x_flat = jnp.pad(x_flat, ((0, Mp - M), (0, 0)))   # padded rows discarded later
    w_c = w_expand.astype(compute_dtype)

    # Constant selector / folded-weight matrices (group axis padded to NG=16;
    # extra columns/rows are zero and contribute nothing).
    group_id = jnp.arange(c4, dtype=jnp.int32) // c_out                    # 0..7
    onehot_f = (group_id[:, None] ==
                jnp.arange(_NG, dtype=jnp.int32)[None, :]).astype(jnp.float32)  # (c4, NG)
    w_sum = jnp.dot(w_c.astype(jnp.float32), onehot_f).astype(compute_dtype)    # (dim, NG)
    gsel = onehot_f.astype(compute_dtype)                                       # (c4, NG)
    gbcast = onehot_f.T.astype(compute_dtype)                                   # (NG, c4)
    gamma_tiled = jnp.tile(gamma.astype(jnp.float32), 8).reshape(1, c4)
    ggamma = (onehot_f.T * gamma_tiled).astype(compute_dtype)                   # (NG, c4)
    beta_tiled = jnp.tile(beta.astype(jnp.float32), 8).reshape(1, c4)           # (1, c4) f32

    kernel = functools.partial(_expand_norm_kernel, eps=eps,
                               inv_c=1.0 / float(c_out), stat_dtype=compute_dtype)
    y = pl.pallas_call(
        kernel,
        out_shape=jax.ShapeDtypeStruct((Mp, c4), out_dtype),
        grid_spec=pltpu.PrefetchScalarGridSpec(
            num_scalar_prefetch=0,
            grid=(Mp // tm,),
            in_specs=[
                pl.BlockSpec((tm, dim), lambda i: (i, 0)),   # x tile
                pl.BlockSpec((dim, c4), lambda i: (0, 0)),   # expand weight
                pl.BlockSpec((dim, _NG), lambda i: (0, 0)),  # folded mean weight
                pl.BlockSpec((c4, _NG), lambda i: (0, 0)),   # group reduce selector
                pl.BlockSpec((_NG, c4), lambda i: (0, 0)),   # group broadcast (mean)
                pl.BlockSpec((_NG, c4), lambda i: (0, 0)),   # group broadcast * gamma
                pl.BlockSpec((1, c4), lambda i: (0, 0)),     # beta (tiled)
            ],
            out_specs=pl.BlockSpec((tm, c4), lambda i: (i, 0)),
        ),
        compiler_params=pltpu.CompilerParams(
            dimension_semantics=("parallel",),
            vmem_limit_bytes=budget),
    )(x_flat, w_c, w_sum, gsel, gbcast, ggamma, beta_tiled)

    y = y[:M]
    # rearrange 'b z h w (p1 p2 p3 c) -> b (z p1) (h p2) (w p3) c' — pure permutation,
    # one XLA transpose pass (see TODO above about fusing into the consumer).
    y = y.reshape(B, Z, H, W, 2, 2, 2, c_out)
    y = y.transpose(0, 1, 4, 2, 5, 3, 6, 7)      # b z p1 h p2 w p3 c
    return y.reshape(B, 8 * L, c_out)


def _reference(x, w_expand, gamma, beta, input_resolution, eps=1e-5,
               compute_dtype=jnp.bfloat16):
    """Same math; the expand matmul mirrors the kernel's compute dtype.
    LayerNorm is exact f32 two-pass."""
    Z, H, W = input_resolution
    B, L, dim = x.shape
    c_out = dim // 2
    prec = (lax.Precision.HIGHEST
            if jnp.dtype(compute_dtype) == jnp.dtype(jnp.float32) else None)
    y = jnp.dot(x.reshape(B * L, dim).astype(compute_dtype),
                w_expand.astype(compute_dtype),
                preferred_element_type=jnp.float32, precision=prec)
    y = y.reshape(B, Z, H, W, 2, 2, 2, c_out)
    y = y.transpose(0, 1, 4, 2, 5, 3, 6, 7).reshape(B, 8 * L, c_out)
    mean = jnp.mean(y, axis=-1, keepdims=True)
    var = jnp.mean((y - mean) ** 2, axis=-1, keepdims=True)
    yn = (y - mean) * lax.rsqrt(var + eps)
    return (yn * gamma + beta).astype(x.dtype)


if __name__ == "__main__":
    key = jax.random.PRNGKey(0)
    k_x, k_w, k_g, k_b = jax.random.split(key, 4)

    B = 2
    Z, H, W = 2, 3, 4          # non-cubic on purpose: exercises the rearrange
    dim = 32
    L = Z * H * W

    x = jax.random.normal(k_x, (B, L, dim), dtype=jnp.float32)
    # nn.Linear(dim, 4*dim, bias=False): torch weight is (4*dim, dim); we pass the
    # (dim, 4*dim) transpose directly (synthetic deterministic init).
    w_expand = jax.random.normal(k_w, (dim, 4 * dim), dtype=jnp.float32) * 0.05
    gamma = 1.0 + 0.1 * jax.random.normal(k_g, (dim // 2,), dtype=jnp.float32)
    beta = 0.1 * jax.random.normal(k_b, (dim // 2,), dtype=jnp.float32)

    # Fast path: bf16 MXU compute (production configuration).
    out = patch_expand3d(x, w_expand, gamma, beta, (Z, H, W))
    out = jax.block_until_ready(out)
    assert out.shape == (B, 8 * L, dim // 2), out.shape
    ref = _reference(x, w_expand, gamma, beta, (Z, H, W))
    assert jnp.allclose(out, ref, atol=2e-2, rtol=2e-2), "bf16 mismatch vs reference"

    # Tight f32-compute check: catches group-ordering / rearrange / weight-layout bugs
    # that a loose bf16 tolerance could hide.
    out32 = patch_expand3d(x, w_expand, gamma, beta, (Z, H, W),
                           compute_dtype=jnp.float32)
    out32 = jax.block_until_ready(out32)
    ref32 = _reference(x, w_expand, gamma, beta, (Z, H, W),
                       compute_dtype=jnp.float32)
    assert jnp.allclose(out32, ref32, atol=2e-3, rtol=2e-3), "f32 mismatch vs reference"

    print("KERNEL_OK")
</pallas_src>

<mosaic_0001>
module attributes {stable_mosaic.version = 11 : i64} {
  func.func @_expand_norm_kernel(%arg0: i32, %arg1: memref<32x32xbf16, #tpu.memory_space<vmem>>, %arg2: memref<32x128xbf16, #tpu.memory_space<vmem>>, %arg3: memref<32x16xbf16, #tpu.memory_space<vmem>>, %arg4: memref<128x16xbf16, #tpu.memory_space<vmem>>, %arg5: memref<16x128xbf16, #tpu.memory_space<vmem>>, %arg6: memref<16x128xbf16, #tpu.memory_space<vmem>>, %arg7: memref<1x128xf32, #tpu.memory_space<vmem>>, %arg8: memref<32x128xf32, #tpu.memory_space<vmem>>) attributes {dimension_semantics = [#tpu.dimension_semantics<parallel>], iteration_bounds = array<i64: 2>, scalar_prefetch = 0 : i64, scratch_operands = 0 : i64, tpu.core_type = #tpu.core_type<tc>, window_params = [{transform_indices = @transform_0, window_bounds = array<i64: 32, 32>}, {pipeline_mode = #tpu.pipeline_mode<synchronous>, transform_indices = @transform_1, window_bounds = array<i64: 32, 128>}, {pipeline_mode = #tpu.pipeline_mode<synchronous>, transform_indices = @transform_2, window_bounds = array<i64: 32, 16>}, {pipeline_mode = #tpu.pipeline_mode<synchronous>, transform_indices = @transform_3, window_bounds = array<i64: 128, 16>}, {pipeline_mode = #tpu.pipeline_mode<synchronous>, transform_indices = @transform_4, window_bounds = array<i64: 16, 128>}, {pipeline_mode = #tpu.pipeline_mode<synchronous>, transform_indices = @transform_5, window_bounds = array<i64: 16, 128>}, {pipeline_mode = #tpu.pipeline_mode<synchronous>, transform_indices = @transform_6, window_bounds = array<i64: 1, 128>}, {transform_indices = @transform_7, window_bounds = array<i64: 32, 128>}]} {
    %c0 = arith.constant 0 : index
    %c0_0 = arith.constant 0 : index
    %0 = vector.load %arg1[%c0, %c0_0] : memref<32x32xbf16, #tpu.memory_space<vmem>>, vector<32x32xbf16>
    %c0_1 = arith.constant 0 : index
    %c0_2 = arith.constant 0 : index
    %1 = vector.load %arg2[%c0_1, %c0_2] : memref<32x128xbf16, #tpu.memory_space<vmem>>, vector<32x128xbf16>
    %cst = arith.constant dense<0.000000e+00> : vector<32x128xf32>
    %2 = tpu.matmul %0, %1, %cst {dimension_numbers = #tpu.dot_dimension_numbers<[1], [0], [0], [1], [0, 0, 1, 1], [], []>} : vector<32x32xbf16>, vector<32x128xbf16>, vector<32x128xf32> -> vector<32x128xf32>
    %c0_3 = arith.constant 0 : index
    %c0_4 = arith.constant 0 : index
    %3 = vector.load %arg3[%c0_3, %c0_4] : memref<32x16xbf16, #tpu.memory_space<vmem>>, vector<32x16xbf16>
    %cst_5 = arith.constant dense<0.000000e+00> : vector<32x16xf32>
    %4 = tpu.matmul %0, %3, %cst_5 {dimension_numbers = #tpu.dot_dimension_numbers<[1], [0], [0], [1], [0, 0, 1, 1], [], []>} : vector<32x32xbf16>, vector<32x16xbf16>, vector<32x16xf32> -> vector<32x16xf32>
    %cst_6 = arith.constant 6.250000e-02 : f32
    %5 = vector.broadcast %cst_6 : f32 to vector<32x16xf32>
    %6 = arith.mulf %4, %5 : vector<32x16xf32>
    %7 = arith.truncf %6 : vector<32x16xf32> to vector<32x16xbf16>
    %c0_7 = arith.constant 0 : index
    %c0_8 = arith.constant 0 : index
    %8 = vector.load %arg5[%c0_7, %c0_8] : memref<16x128xbf16, #tpu.memory_space<vmem>>, vector<16x128xbf16>
    %cst_9 = arith.constant dense<0.000000e+00> : vector<32x128xf32>
    %9 = tpu.matmul %7, %8, %cst_9 {dimension_numbers = #tpu.dot_dimension_numbers<[1], [0], [0], [1], [0, 0, 1, 1], [], []>} : vector<32x16xbf16>, vector<16x128xbf16>, vector<32x128xf32> -> vector<32x128xf32>
    %10 = arith.subf %2, %9 : vector<32x128xf32>
    %11 = arith.truncf %10 : vector<32x128xf32> to vector<32x128xbf16>
    %12 = arith.mulf %11, %11 : vector<32x128xbf16>
    %c0_10 = arith.constant 0 : index
    %c0_11 = arith.constant 0 : index
    %13 = vector.load %arg4[%c0_10, %c0_11] : memref<128x16xbf16, #tpu.memory_space<vmem>>, vector<128x16xbf16>
    %cst_12 = arith.constant dense<0.000000e+00> : vector<32x16xf32>
    %14 = tpu.matmul %12, %13, %cst_12 {dimension_numbers = #tpu.dot_dimension_numbers<[1], [0], [0], [1], [0, 0, 1, 1], [], []>} : vector<32x128xbf16>, vector<128x16xbf16>, vector<32x16xf32> -> vector<32x16xf32>
    %cst_13 = arith.constant 6.250000e-02 : f32
    %15 = vector.broadcast %cst_13 : f32 to vector<32x16xf32>
    %16 = arith.mulf %14, %15 : vector<32x16xf32>
    %cst_14 = arith.constant 9.99999974E-6 : f32
    %17 = vector.broadcast %cst_14 : f32 to vector<32x16xf32>
    %18 = arith.addf %16, %17 : vector<32x16xf32>
    %19 = math.rsqrt %18 : vector<32x16xf32>
    %20 = arith.truncf %19 : vector<32x16xf32> to vector<32x16xbf16>
    %c0_15 = arith.constant 0 : index
    %c0_16 = arith.constant 0 : index
    %21 = vector.load %arg6[%c0_15, %c0_16] : memref<16x128xbf16, #tpu.memory_space<vmem>>, vector<16x128xbf16>
    %cst_17 = arith.constant dense<0.000000e+00> : vector<32x128xf32>
    %22 = tpu.matmul %20, %21, %cst_17 {dimension_numbers = #tpu.dot_dimension_numbers<[1], [0], [0], [1], [0, 0, 1, 1], [], []>} : vector<32x16xbf16>, vector<16x128xbf16>, vector<32x128xf32> -> vector<32x128xf32>
    %23 = arith.mulf %10, %22 : vector<32x128xf32>
    %c0_18 = arith.constant 0 : index
    %c0_19 = arith.constant 0 : index
    %24 = vector.load %arg7[%c0_18, %c0_19] : memref<1x128xf32, #tpu.memory_space<vmem>>, vector<1x128xf32>
    %25 = vector.broadcast %24 : vector<1x128xf32> to vector<32x128xf32>
    %26 = arith.addf %23, %25 : vector<32x128xf32>
    %c0_20 = arith.constant 0 : index
    %c0_21 = arith.constant 0 : index
    %27 = vector.load %arg8[%c0_20, %c0_21] : memref<32x128xf32, #tpu.memory_space<vmem>>, vector<32x128xf32>
    tpu.vector_store %arg8[%c0_20, %c0_21], %26 {strides = array<i32>} : memref<32x128xf32, #tpu.memory_space<vmem>>, vector<32x128xf32>,
    return
  }
  func.func @transform_0(%arg0: i32) -> (i32, i32) {
    %c0_i32 = arith.constant 0 : i32
    %c0_i32_0 = arith.constant 0 : i32
    return %arg0, %c0_i32 : i32, i32
  }
  func.func @transform_1(%arg0: i32) -> (i32, i32) {
    %c0_i32 = arith.constant 0 : i32
    %c0_i32_0 = arith.constant 0 : i32
    %c0_i32_1 = arith.constant 0 : i32
    return %c0_i32, %c0_i32_0 : i32, i32
  }
  func.func @transform_2(%arg0: i32) -> (i32, i32) {
    %c0_i32 = arith.constant 0 : i32
    %c0_i32_0 = arith.constant 0 : i32
    %c0_i32_1 = arith.constant 0 : i32
    return %c0_i32, %c0_i32_0 : i32, i32
  }
  func.func @transform_3(%arg0: i32) -> (i32, i32) {
    %c0_i32 = arith.constant 0 : i32
    %c0_i32_0 = arith.constant 0 : i32
    %c0_i32_1 = arith.constant 0 : i32
    return %c0_i32, %c0_i32_0 : i32, i32
  }
  func.func @transform_4(%arg0: i32) -> (i32, i32) {
    %c0_i32 = arith.constant 0 : i32
    %c0_i32_0 = arith.constant 0 : i32
    %c0_i32_1 = arith.constant 0 : i32
    return %c0_i32, %c0_i32_0 : i32, i32
  }
  func.func @transform_5(%arg0: i32) -> (i32, i32) {
    %c0_i32 = arith.constant 0 : i32
    %c0_i32_0 = arith.constant 0 : i32
    %c0_i32_1 = arith.constant 0 : i32
    return %c0_i32, %c0_i32_0 : i32, i32
  }
  func.func @transform_6(%arg0: i32) -> (i32, i32) {
    %c0_i32 = arith.constant 0 : i32
    %c0_i32_0 = arith.constant 0 : i32
    %c0_i32_1 = arith.constant 0 : i32
    return %c0_i32, %c0_i32_0 : i32, i32
  }
  func.func @transform_7(%arg0: i32) -> (i32, i32) {
    %c0_i32 = arith.constant 0 : i32
    %c0_i32_0 = arith.constant 0 : i32
    return %arg0, %c0_i32 : i32, i32
  }
}

</mosaic_0001>

<llo_original>
// kernel: tpu_custom_call.1
$region0: #{tpu_custom_call.1}
  #allocation0 [shape = 'u32[]', space=smem, size = 0x4, offset = 0x4, fixed_abs, tag = 'smem constant byte address 0x4 - core index']
  #allocation1 [shape = 'u32[144,128]{1,0:T(1,128)}', space=vmem, size = 0x12000, scoped, tag = 'internal scratch']
  %s0 = inlined_call_operand.hbm [shape: bf16[64,32], index: 0, kind: input, shape index: {}]
  %s1 = inlined_call_operand.hbm [shape: bf16[32,128], index: 1, kind: input, shape index: {}]
  %s2 = inlined_call_operand.hbm [shape: bf16[32,16], index: 2, kind: input, shape index: {}]
  %s3 = inlined_call_operand.hbm [shape: bf16[128,16], index: 3, kind: input, shape index: {}]
  %s4 = inlined_call_operand.hbm [shape: bf16[16,128], index: 4, kind: input, shape index: {}]
  %s5 = inlined_call_operand.hbm [shape: bf16[16,128], index: 5, kind: input, shape index: {}]
  %s6 = inlined_call_operand.hbm [shape: f32[1,128], index: 6, kind: input, shape index: {}]
  %s7 = inlined_call_operand.hbm [shape: f32[64,128], index: 7, kind: output, shape index: {}]
  %s8 = sld [smem:[#allocation0]]
  $region89: #{tpu_custom_call.1} parent=0
    _
  %s10 = ssub.s32 1, %s8
  %s11 = scalar_select 0, %s10, %s8
  $region1: #{tpu_custom_call.1} parent=0
    #allocation2 [shape = 'u8[16384]{0}', space=vmem, size = 0x4000, scoped, tag = 'input window, operand 0']
    #allocation3 [shape = 's32[2]{0}', space=sflag, size = 0x8, scoped, tag = 'scoped memory for tpu_custom_call.1']
    #allocation4 [shape = 's32[2]{0}', space=sflag, size = 0x8, scoped, tag = 'scoped memory for tpu_custom_call.1']
    #allocation5 [shape = 'u8[8192]{0}', space=vmem, size = 0x2000, scoped, tag = 'input window, operand 1, single buffered']
    #allocation6 [shape = 's32[1]{0}', space=sflag, size = 0x4, scoped, tag = 'scoped memory for tpu_custom_call.1']
    #allocation7 [shape = 'u8[8192]{0}', space=vmem, size = 0x2000, scoped, tag = 'input window, operand 2, single buffered']
    #allocation8 [shape = 'u8[32768]{0}', space=vmem, size = 0x8000, scoped, tag = 'input window, operand 3, single buffered']
    #allocation9 [shape = 's32[1]{0}', space=sflag, size = 0x4, scoped, tag = 'scoped memory for tpu_custom_call.1']
    #allocation10 [shape = 'u8[4096]{0}', space=vmem, size = 0x1000, scoped, tag = 'input window, operand 4, single buffered']
    #allocation11 [shape = 'u8[4096]{0}', space=vmem, size = 0x1000, scoped, tag = 'input window, operand 5, single buffered']
    #allocation12 [shape = 's32[1]{0}', space=sflag, size = 0x4, scoped, tag = 'scoped memory for tpu_custom_call.1']
    #allocation13 [shape = 'u8[512]{0}', space=vmem, size = 0x400, scoped, tag = 'input window, operand 6, single buffered']
    #allocation14 [shape = 'u8[32768]{0}', space=vmem, size = 0x8000, scoped, tag = 'output window, operand 0']
    %12 = vsyncpa [#allocation3], 0
    %s13 = scalar_lea.sflag [#allocation3], 1
    %14 = vsyncpa %s13, 0
    %15 = vsyncpa [#allocation6], 0
    %16 = vsyncpa [#allocation9], 0
    %17 = vsyncpa [#allocation12], 0
    %18 = vsyncpa [#allocation4], 0
    %s19 = scalar_lea.sflag [#allocation4], 1
    %20 = vsyncpa %s19, 0
    loop: start=0, step=1, limit=4
    $region2: #{tpu_custom_call.1} parent=1 // loop_pre_header
      _
    $region3: #{tpu_custom_call.1} parent=1 // loop_header
      %s22 = sphi 0, %s26
      %p23 = scmp.ge.s32.totalorder %s22, 4
      %s32 = sphi 0, %s34
      %s35 = sphi 0, %s32
      %s36 = sphi 0, %s35
      %s52 = sphi 0, %s36
      %s56 = sphi 0, %s56
      %s58 = sphi 0, %s56
      %s59 = sphi 0, %s58
      %s73 = sphi 0, %s59
      %s77 = sphi 0, %s77
      %s79 = sphi 0, %s77
      %s80 = sphi 0, %s79
      %s94 = sphi 0, %s80
      %s98 = sphi 0, %s98
      %s100 = sphi 0, %s98
      %s101 = sphi 0, %s100
      %s115 = sphi 0, %s101
      %s119 = sphi 0, %s119
      %s121 = sphi 0, %s119
      %s122 = sphi 0, %s121
      %s136 = sphi 0, %s122
      %s140 = sphi 0, %s140
      %s142 = sphi 0, %s140
      %s143 = sphi 0, %s142
      %s157 = sphi 0, %s143
      %s161 = sphi 0, %s161
      %s163 = sphi 0, %s161
      %s164 = sphi 0, %s163
      %s178 = sphi 0, %s164
      %s184 = sphi 0, %s186
      %s187 = sphi 0, %s184
      %s188 = sphi 0, %s187
      %s204 = sphi 0, %s188
    $region4: #{tpu_custom_call.1} parent=1 // loop_header_branch
      %25 = sbr.rel (%p23) target = $region8
    $region5: #{tpu_custom_call.1} parent=1 // loop_body
      %s27 = ssub.s32 %s22, 1
      %s28 = ssub.s32 %s22, 2
      %s29 = sadd.s32 %s22, 1
      %s30 = ssub.s32 %s22, %s29
      %p31 = scmp.eq.s32.totalorder %s30, 0
      %s33 = sadd.s32 %s32, 1
      %s34 = scalar_select %p31, %s32, %s33
      %p37 = pneg %p31
      %p38 = scmp.eq.s32.totalorder %s22, 1
      %p39 = por %p37, %p38
      %p40 = scmp.ne.s32.totalorder %s32, %s35
      %p41 = scmp.eq.s32.totalorder %s22, 0
      %p42 = por %p40, %p41
      %p43 = scmp.ne.s32.totalorder %s32, %s35
      %p44 = scmp.eq.s32.totalorder %s27, 1
      %p45 = por %p43, %p44
      %p46 = scmp.ne.s32.totalorder %s35, %s36
      %p47 = scmp.eq.s32.totalorder %s27, 0
      %p48 = por %p46, %p47
      %p49 = scmp.ne.s32.totalorder %s35, %s36
      %p50 = scmp.eq.s32.totalorder %s28, 1
      %p51 = por %p49, %p50
      %p53 = scmp.ne.s32.totalorder %s36, %s52
      %p54 = scmp.eq.s32.totalorder %s28, 0
      %p55 = por %p53, %p54
      %s57 = sadd.s32 %s56, 1
      %p60 = scmp.eq.s32.totalorder %s22, 1
      %p61 = scmp.ne.s32.totalorder %s56, %s58
      %p62 = scmp.eq.s32.totalorder %s22, 0
      %p63 = por %p61, %p62
      %p64 = scmp.ne.s32.totalorder %s56, %s58
      %p65 = scmp.eq.s32.totalorder %s27, 1
      %p66 = por %p64, %p65
      %p67 = scmp.ne.s32.totalorder %s58, %s59
      %p68 = scmp.eq.s32.totalorder %s27, 0
      %p69 = por %p67, %p68
      %p70 = scmp.ne.s32.totalorder %s58, %s59
      %p71 = scmp.eq.s32.totalorder %s28, 1
      %p72 = por %p70, %p71
      %p74 = scmp.ne.s32.totalorder %s59, %s73
      %p75 = scmp.eq.s32.totalorder %s28, 0
      %p76 = por %p74, %p75
      %s78 = sadd.s32 %s77, 1
      %p81 = scmp.eq.s32.totalorder %s22, 1
      %p82 = scmp.ne.s32.totalorder %s77, %s79
      %p83 = scmp.eq.s32.totalorder %s22, 0
      %p84 = por %p82, %p83
      %p85 = scmp.ne.s32.totalorder %s77, %s79
      %p86 = scmp.eq.s32.totalorder %s27, 1
      %p87 = por %p85, %p86
      %p88 = scmp.ne.s32.totalorder %s79, %s80
      %p89 = scmp.eq.s32.totalorder %s27, 0
      %p90 = por %p88, %p89
      %p91 = scmp.ne.s32.totalorder %s79, %s80
      %p92 = scmp.eq.s32.totalorder %s28, 1
      %p93 = por %p91, %p92
      %p95 = scmp.ne.s32.totalorder %s80, %s94
      %p96 = scmp.eq.s32.totalorder %s28, 0
      %p97 = por %p95, %p96
      %s99 = sadd.s32 %s98, 1
      %p102 = scmp.eq.s32.totalorder %s22, 1
      %p103 = scmp.ne.s32.totalorder %s98, %s100
      %p104 = scmp.eq.s32.totalorder %s22, 0
      %p105 = por %p103, %p104
      %p106 = scmp.ne.s32.totalorder %s98, %s100
      %p107 = scmp.eq.s32.totalorder %s27, 1
      %p108 = por %p106, %p107
      %p109 = scmp.ne.s32.totalorder %s100, %s101
      %p110 = scmp.eq.s32.totalorder %s27, 0
      %p111 = por %p109, %p110
      %p112 = scmp.ne.s32.totalorder %s100, %s101
      %p113 = scmp.eq.s32.totalorder %s28, 1
      %p114 = por %p112, %p113
      %p116 = scmp.ne.s32.totalorder %s101, %s115
      %p117 = scmp.eq.s32.totalorder %s28, 0
      %p118 = por %p116, %p117
      %s120 = sadd.s32 %s119, 1
      %p123 = scmp.eq.s32.totalorder %s22, 1
      %p124 = scmp.ne.s32.totalorder %s119, %s121
      %p125 = scmp.eq.s32.totalorder %s22, 0
      %p126 = por %p124, %p125
      %p127 = scmp.ne.s32.totalorder %s119, %s121
      %p128 = scmp.eq.s32.totalorder %s27, 1
      %p129 = por %p127, %p128
      %p130 = scmp.ne.s32.totalorder %s121, %s122
      %p131 = scmp.eq.s32.totalorder %s27, 0
      %p132 = por %p130, %p131
      %p133 = scmp.ne.s32.totalorder %s121, %s122
      %p134 = scmp.eq.s32.totalorder %s28, 1
      %p135 = por %p133, %p134
      %p137 = scmp.ne.s32.totalorder %s122, %s136
      %p138 = scmp.eq.s32.totalorder %s28, 0
      %p139 = por %p137, %p138
      %s141 = sadd.s32 %s140, 1
      %p144 = scmp.eq.s32.totalorder %s22, 1
      %p145 = scmp.ne.s32.totalorder %s140, %s142
      %p146 = scmp.eq.s32.totalorder %s22, 0
      %p147 = por %p145, %p146
      %p148 = scmp.ne.s32.totalorder %s140, %s142
      %p149 = scmp.eq.s32.totalorder %s27, 1
      %p150 = por %p148, %p149
      %p151 = scmp.ne.s32.totalorder %s142, %s143
      %p152 = scmp.eq.s32.totalorder %s27, 0
      %p153 = por %p151, %p152
      %p154 = scmp.ne.s32.totalorder %s142, %s143
      %p155 = scmp.eq.s32.totalorder %s28, 1
      %p156 = por %p154, %p155
      %p158 = scmp.ne.s32.totalorder %s143, %s157
      %p159 = scmp.eq.s32.totalorder %s28, 0
      %p160 = por %p158, %p159
      %s162 = sadd.s32 %s161, 1
      %p165 = scmp.eq.s32.totalorder %s22, 1
      %p166 = scmp.ne.s32.totalorder %s161, %s163
      %p167 = scmp.eq.s32.totalorder %s22, 0
      %p168 = por %p166, %p167
      %p169 = scmp.ne.s32.totalorder %s161, %s163
      %p170 = scmp.eq.s32.totalorder %s27, 1
      %p171 = por %p169, %p170
      %p172 = scmp.ne.s32.totalorder %s163, %s164
      %p173 = scmp.eq.s32.totalorder %s27, 0
      %p174 = por %p172, %p173
      %p175 = scmp.ne.s32.totalorder %s163, %s164
      %p176 = scmp.eq.s32.totalorder %s28, 1
      %p177 = por %p175, %p176
      %p179 = scmp.ne.s32.totalorder %s164, %s178
      %p180 = scmp.eq.s32.totalorder %s28, 0
      %p181 = por %p179, %p180
      %s182 = ssub.s32 %s22, %s29
      %p183 = scmp.eq.s32.totalorder %s182, 0
      %s185 = sadd.s32 %s184, 1
      %s186 = scalar_select %p183, %s184, %s185
      %p189 = pneg %p183
      %p190 = scmp.eq.s32.totalorder %s22, 1
      %p191 = por %p189, %p190
      %p192 = scmp.ne.s32.totalorder %s184, %s187
      %p193 = scmp.eq.s32.totalorder %s22, 0
      %p194 = por %p192, %p193
      %p195 = scmp.ne.s32.totalorder %s184, %s187
      %p196 = scmp.eq.s32.totalorder %s27, 1
      %p197 = por %p195, %p196
      %p198 = scmp.ne.s32.totalorder %s187, %s188
      %p199 = scmp.eq.s32.totalorder %s27, 0
      %p200 = por %p198, %p199
      %p201 = scmp.ne.s32.totalorder %s187, %s188
      %p202 = scmp.eq.s32.totalorder %s28, 1
      %p203 = por %p201, %p202
      %p205 = scmp.ne.s32.totalorder %s188, %s204
      %p206 = scmp.eq.s32.totalorder %s28, 0
      %p207 = por %p205, %p206
      %p208 = scmp.le.s32.totalorder 1, %s22
      %p209 = scmp.lt.s32.totalorder %s22, 3
      %p210 = pnand %p208, %p209
      %p211 = pneg %p210
      // Predicated region
      $region9: #{tpu_custom_call.1} parent=5 // pred_check
        _
      $region10: #{tpu_custom_call.1} parent=5 // pred_check_branch
        %213 = sbr.rel (%p210) target = $region12
      $region11: #{tpu_custom_call.1} parent=5 // pred_region
        %s214 = ssub.s32 %s22, 1
        // Predicated region
        $region13: #{tpu_custom_call.1} parent=11 // pred_check
          %p215 = pneg %p69
        $region14: #{tpu_custom_call.1} parent=11 // pred_check_branch
          %217 = sbr.rel (%p215) target = $region16
        $region15: #{tpu_custom_call.1} parent=11 // pred_region
          %s219 = ssub.s32 256, 256
          %220 = vsyncadd [#allocation6], %s219
          %s221 = sshll.u32 [#allocation5], 4
          %s222 = int_to_ptr.vmem [resolvable:$true] %s221
          %227 = dma.hbm_to_vmem [thread:$0]  %s1, 256, %s222, [#allocation6], 64, 64, 4
        $region16: #{tpu_custom_call.1} parent=11 // pred_fallthru
          _
        // Predicated region
        $region17: #{tpu_custom_call.1} parent=11 // pred_check
          %p228 = pneg %p90
        $region18: #{tpu_custom_call.1} parent=11 // pred_check_branch
          %230 = sbr.rel (%p228) target = $region20
        $region19: #{tpu_custom_call.1} parent=11 // pred_region
          %s232 = ssub.s32 256, 256
          %233 = vsyncadd [#allocation6], %s232
          %s234 = sshll.u32 [#allocation7], 4
          %s235 = int_to_ptr.vmem [resolvable:$true] %s234
          %240 = dma.hbm_to_vmem [thread:$0]  %s2, 256, %s235, [#allocation6], 64, 64, 4
        $region20: #{tpu_custom_call.1} parent=11 // pred_fallthru
          _
        // Predicated region
        $region21: #{tpu_custom_call.1} parent=11 // pred_check
          %p241 = pneg %p111
        $region22: #{tpu_custom_call.1} parent=11 // pred_check_branch
          %243 = sbr.rel (%p241) target = $region24
        $region23: #{tpu_custom_call.1} parent=11 // pred_region
          %s245 = ssub.s32 1024, 1024
          %246 = vsyncadd [#allocation9], %s245
          %s247 = sshll.u32 [#allocation8], 4
          %s248 = int_to_ptr.vmem [resolvable:$true] %s247
          %253 = dma.hbm_to_vmem [thread:$0]  %s3, 1024, %s248, [#allocation9], 64, 64, 4
        $region24: #{tpu_custom_call.1} parent=11 // pred_fallthru
          _
        // Predicated region
        $region25: #{tpu_custom_call.1} parent=11 // pred_check
          %p254 = pneg %p132
        $region26: #{tpu_custom_call.1} parent=11 // pred_check_branch
          %256 = sbr.rel (%p254) target = $region28
        $region27: #{tpu_custom_call.1} parent=11 // pred_region
          %s258 = ssub.s32 128, 128
          %259 = vsyncadd [#allocation9], %s258
          %s260 = sshll.u32 [#allocation10], 4
          %s261 = int_to_ptr.vmem [resolvable:$true] %s260
          %266 = dma.hbm_to_vmem [thread:$0]  %s4, 128, %s261, [#allocation9], 64, 64, 4
        $region28: #{tpu_custom_call.1} parent=11 // pred_fallthru
          _
        // Predicated region
        $region29: #{tpu_custom_call.1} parent=11 // pred_check
          %p267 = pneg %p153
        $region30: #{tpu_custom_call.1} parent=11 // pred_check_branch
          %269 = sbr.rel (%p267) target = $region32
        $region31: #{tpu_custom_call.1} parent=11 // pred_region
          %s271 = ssub.s32 128, 128
          %272 = vsyncadd [#allocation12], %s271
          %s273 = sshll.u32 [#allocation11], 4
          %s274 = int_to_ptr.vmem [resolvable:$true] %s273
          %279 = dma.hbm_to_vmem [thread:$0]  %s5, 128, %s274, [#allocation12], 64, 64, 4
        $region32: #{tpu_custom_call.1} parent=11 // pred_fallthru
          _
        // Predicated region
        $region33: #{tpu_custom_call.1} parent=11 // pred_check
          %p280 = pneg %p174
        $region34: #{tpu_custom_call.1} parent=11 // pred_check_branch
          %282 = sbr.rel (%p280) target = $region36
        $region35: #{tpu_custom_call.1} parent=11 // pred_region
          %s284 = ssub.s32 16, 16
          %285 = vsyncadd [#allocation12], %s284
          %s287 = sshll.u32 [#allocation13], 4
          %s288 = int_to_ptr.vmem [resolvable:$true] %s287
          %290 = dma.hbm_to_vmem [thread:$0]  %s6, 16, %s288, [#allocation12]
        $region36: #{tpu_custom_call.1} parent=11 // pred_fallthru
          _
      $region12: #{tpu_custom_call.1} parent=5 // pred_fallthru
        _
      %p291 = scmp.lt.s32.totalorder %s22, 2
      // Predicated region
      $region37: #{tpu_custom_call.1} parent=5 // pred_check
        %p292 = pneg %p291
      $region38: #{tpu_custom_call.1} parent=5 // pred_check_branch
        %294 = sbr.rel (%p292) target = $region40
      $region39: #{tpu_custom_call.1} parent=5 // pred_region
        // Predicated region
        $region41: #{tpu_custom_call.1} parent=39 // pred_check
          %p295 = pneg %p42
        $region42: #{tpu_custom_call.1} parent=39 // pred_check_branch
          %297 = sbr.rel (%p295) target = $region44
        $region43: #{tpu_custom_call.1} parent=39 // pred_region
          %s298 = sand.u32 %s32, 1
          %s299 = scalar_lea.sflag [#allocation3], %s298
          %s300 = sand.u32 %s32, 1
          %s301 = smul.addr %s300, 16
          %s302 = scalar_lea.vmem [#allocation2], %s301
          %s303 = smul.u32 4, %s22
          %s305 = ssub.s32 256, 256
          %306 = vsyncadd %s299, %s305
          %s307 = smul.addr %s303, 64
          %s308 = scalar_lea.hbm %s0, %s307
          %s309 = sshll.u32 %s302, 4
          %s310 = int_to_ptr.vmem [resolvable:$true] %s309
          %315 = dma.hbm_to_vmem [thread:$0]  %s308, 256, %s310, %s299, 64, 64, 4
        $region44: #{tpu_custom_call.1} parent=39 // pred_fallthru
          _
      $region40: #{tpu_custom_call.1} parent=5 // pred_fallthru
        _
      %p316 = scmp.le.s32.totalorder 1, %s22
      %p317 = scmp.lt.s32.totalorder %s22, 3
      %p318 = pnand %p316, %p317
      %p319 = pneg %p318
      // Predicated region
      $region45: #{tpu_custom_call.1} parent=5 // pred_check
        _
      $region46: #{tpu_custom_call.1} parent=5 // pred_check_branch
        %321 = sbr.rel (%p318) target = $region48
      $region47: #{tpu_custom_call.1} parent=5 // pred_region
        %s322 = ssub.s32 %s22, 1
        %s323 = sand.u32 %s35, 1
        %s324 = scalar_lea.sflag [#allocation3], %s323
        %s325 = sand.u32 %s35, 1
        %s326 = smul.addr %s325, 16
        %s327 = scalar_lea.vmem [#allocation2], %s326
        // Predicated region
        $region49: #{tpu_custom_call.1} parent=47 // pred_check
          %p328 = pneg %p48
        $region50: #{tpu_custom_call.1} parent=47 // pred_check_branch
          %330 = sbr.rel (%p328) target = $region52
        $region51: #{tpu_custom_call.1} parent=47 // pred_region
          %331 = dma.done %s324, 256
        $region52: #{tpu_custom_call.1} parent=47 // pred_fallthru
          _
        // Predicated region
        $region53: #{tpu_custom_call.1} parent=47 // pred_check
          %p332 = pneg %p69
        $region54: #{tpu_custom_call.1} parent=47 // pred_check_branch
          %334 = sbr.rel (%p332) target = $region56
        $region55: #{tpu_custom_call.1} parent=47 // pred_region
          %335 = dma.done [#allocation6], 256
        $region56: #{tpu_custom_call.1} parent=47 // pred_fallthru
          _
        // Predicated region
        $region57: #{tpu_custom_call.1} parent=47 // pred_check
          %p336 = pneg %p90
        $region58: #{tpu_custom_call.1} parent=47 // pred_check_branch
          %338 = sbr.rel (%p336) target = $region60
        $region59: #{tpu_custom_call.1} parent=47 // pred_region
          %339 = dma.done [#allocation6], 256
        $region60: #{tpu_custom_call.1} parent=47 // pred_fallthru
          _
        // Predicated region
        $region61: #{tpu_custom_call.1} parent=47 // pred_check
          %p340 = pneg %p111
        $region62: #{tpu_custom_call.1} parent=47 // pred_check_branch
          %342 = sbr.rel (%p340) target = $region64
        $region63: #{tpu_custom_call.1} parent=47 // pred_region
          %343 = dma.done [#allocation9], 1024
        $region64: #{tpu_custom_call.1} parent=47 // pred_fallthru
          _
        // Predicated region
        $region65: #{tpu_custom_call.1} parent=47 // pred_check
          %p344 = pneg %p132
        $region66: #{tpu_custom_call.1} parent=47 // pred_check_branch
          %346 = sbr.rel (%p344) target = $region68
        $region67: #{tpu_custom_call.1} parent=47 // pred_region
          %347 = dma.done [#allocation9], 128
        $region68: #{tpu_custom_call.1} parent=47 // pred_fallthru
          _
        // Predicated region
        $region69: #{tpu_custom_call.1} parent=47 // pred_check
          %p348 = pneg %p153
        $region70: #{tpu_custom_call.1} parent=47 // pred_check_branch
          %350 = sbr.rel (%p348) target = $region72
        $region71: #{tpu_custom_call.1} parent=47 // pred_region
          %351 = dma.done [#allocation12], 128
        $region72: #{tpu_custom_call.1} parent=47 // pred_fallthru
          _
        // Predicated region
        $region73: #{tpu_custom_call.1} parent=47 // pred_check
          %p352 = pneg %p174
        $region74: #{tpu_custom_call.1} parent=47 // pred_check_branch
          %354 = sbr.rel (%p352) target = $region76
        $region75: #{tpu_custom_call.1} parent=47 // pred_region
          %355 = dma.done [#allocation12], 16
        $region76: #{tpu_custom_call.1} parent=47 // pred_fallthru
          _
        %s356 = sand.u32 %s35, 1
        %s357 = scalar_lea.sflag [#allocation3], %s356
        %s358 = sand.u32 %s35, 1
        %s359 = smul.addr %s358, 16
        %s360 = scalar_lea.vmem [#allocation2], %s359
        %p361 = pneg %p48
        %p362 = pneg %p45
        %p363 = pneg %p69
        %p364 = pneg %p66
        %p365 = pneg %p90
        %p366 = pneg %p87
        %p367 = pneg %p111
        %p368 = pneg %p108
        %p369 = pneg %p132
        %p370 = pneg %p129
        %p371 = pneg %p153
        %p372 = pneg %p150
        %p373 = pneg %p174
        %p374 = pneg %p171
        %p375 = pneg %p200
        %p376 = pneg %p197
        %s377 = sand.u32 %s187, 1
        %s378 = scalar_lea.sflag [#allocation4], %s377
        %s379 = sand.u32 %s187, 1
        %s380 = smul.addr %s379, 32
        %s381 = scalar_lea.vmem [#allocation14], %s380
        %s382 = smul.u32 4, %s27
        %s383 = smul.u32 4, %s27
        %v385 = vld [vmem:[%s327] sm:$0xf]
        %v386 = vld [vmem:[%s327 + $0x4] sm:$0xf]
        %v387 = vld [vmem:[%s327 + $0x8] sm:$0xf]
        %v388 = vld [vmem:[%s327 + $0xc] sm:$0xf]
        %v389 = vld [vmem:[#allocation5] sm:$0xf]
        %v390 = vld [vmem:[#allocation5 + $0x4] sm:$0xf]
        %v391 = vld [vmem:[#allocation5 + $0x8] sm:$0xf]
        %v392 = vld [vmem:[#allocation5 + $0xc] sm:$0xf]
        %v397 = vunpack.c.l.b16 %v385
        %v398 = vunpack.c.l.b16 %v386
        %v399 = vunpack.c.l.b16 %v387
        %v400 = vunpack.c.l.b16 %v388
        %v401 = vpack.c.b16 %v398, %v397
        %v402 = vpack.c.b16 %v400, %v399
        %v407 = vunpack.c.l.b16 %v389
        %v408 = vunpack.c.l.b16 %v390
        %v409 = vunpack.c.l.b16 %v391
        %v410 = vunpack.c.l.b16 %v392
        %v411 = vpack.c.b16 %v408, %v407
        %v412 = vpack.c.b16 %v410, %v409
        %vm415 = vcmask 261120
        %v417 = vsel %vm415, %v401, 0
        %v420 = vsel %vm415, %v402, 0
        %422 = vmatprep.subr.bf16.mxu0 0
        %423 = vmatpush1.bf16.msra.mxu0 %v411
        %424 = vmatprep.subr.bf16.mxu0 0
        %425 = vmatpush1.bf16.msra.mxu0 %v412
        %426 = vmatprep.subr.bf16.mxu0 0
        %427 = vmatpush1.bf16.msra.mxu0 0
        %428 = vmatprep.subr.bf16.mxu0 0
        %429 = vmatpush1.bf16.msra.mxu0 0
        %430 = vmatprep.subr.bf16.mxu0 0
        %431 = vmatpush1.bf16.msra.mxu0 0
        %432 = vmatprep.subr.bf16.mxu0 0
        %433 = vmatpush1.bf16.msra.mxu0 0
        %434 = vmatprep.subr.bf16.mxu0 0
        %435 = vmatpush1.bf16.msra.mxu0 0
        %436 = vmatprep.subr.bf16.mxu0 0
        %437 = vmatpush1.bf16.msra.mxu0 0
        %438 = vmatprep.subr.bf16.mxu0 0
        %439 = vmatpush1.bf16.msra.mxu0 0
        %440 = vmatprep.subr.bf16.mxu0 0
        %441 = vmatpush1.bf16.msra.mxu0 0
        %442 = vmatprep.subr.bf16.mxu0 0
        %443 = vmatpush1.bf16.msra.mxu0 0
        %444 = vmatprep.subr.bf16.mxu0 0
        %445 = vmatpush1.bf16.msra.mxu0 0
        %446 = vmatprep.subr.bf16.mxu0 0
        %447 = vmatpush1.bf16.msra.mxu0 0
        %448 = vmatprep.subr.bf16.mxu0 0
        %449 = vmatpush1.bf16.msra.mxu0 0
        %450 = vmatprep.subr.bf16.mxu0 0
        %451 = vmatpush1.bf16.msra.mxu0 0
        %452 = vmatprep.subr.bf16.mxu0 0
        %453 = vmatpush1.bf16.msra.mxu0 0
        %454 = vmatprep.mubr.bf16.mxu0 0
        %455 = vmatmul.mubr.bf16.gmra.mrb[0].mxu0 %v417
        %v456 = vpop.f32.mrb[0].mxu0
        %v457 = vadd.f32 0.0, %v456
        %v458 = vpop.f32.mrb[0].mxu0
        %v459 = vpop.f32.mrb[0].mxu0
        %v460 = vadd.f32 0.0, %v459
        %v461 = vpop.f32.mrb[0].mxu0
        %462 = vmatprep.mubr.bf16.mxu0 0
        %463 = vmatmul.mubr.bf16.gmra.mrb[0].mxu0 %v420
        %v464 = vpop.f32.mrb[0].mxu0
        %v465 = vadd.f32 0.0, %v464
        %v466 = vpop.f32.mrb[0].mxu0
        %v467 = vpop.f32.mrb[0].mxu0
        %v468 = vadd.f32 0.0, %v467
        %v469 = vpop.f32.mrb[0].mxu0
        %470 = vdwg.mxu0
        %v471 = vld [vmem:[#allocation7] sm:$0xf]
        %v472 = vld [vmem:[#allocation7 + $0x4] sm:$0xf]
        %v473 = vld [vmem:[#allocation7 + $0x8] sm:$0xf]
        %v474 = vld [vmem:[#allocation7 + $0xc] sm:$0xf]
        %v479 = vunpack.c.l.b16 %v471
        %v480 = vunpack.c.l.b16 %v472
        %v481 = vunpack.c.l.b16 %v473
        %v482 = vunpack.c.l.b16 %v474
        %v483 = vpack.c.b16 %v480, %v479
        %v484 = vpack.c.b16 %v482, %v481
        %487 = vmatprep.subr.bf16.mxu0 0
        %488 = vmatpush1.bf16.msra.mxu0 %v483
        %489 = vmatprep.subr.bf16.mxu0 0
        %490 = vmatpush1.bf16.msra.mxu0 %v484
        %491 = vmatprep.subr.bf16.mxu0 0
        %492 = vmatpush1.bf16.msra.mxu0 0
        %493 = vmatprep.subr.bf16.mxu0 0
        %494 = vmatpush1.bf16.msra.mxu0 0
        %495 = vmatprep.subr.bf16.mxu0 0
        %496 = vmatpush1.bf16.msra.mxu0 0
        %497 = vmatprep.subr.bf16.mxu0 0
        %498 = vmatpush1.bf16.msra.mxu0 0
        %499 = vmatprep.subr.bf16.mxu0 0
        %500 = vmatpush1.bf16.msra.mxu0 0
        %501 = vmatprep.subr.bf16.mxu0 0
        %502 = vmatpush1.bf16.msra.mxu0 0
        %503 = vmatprep.subr.bf16.mxu0 0
        %504 = vmatpush1.bf16.msra.mxu0 0
        %505 = vmatprep.subr.bf16.mxu0 0
        %506 = vmatpush1.bf16.msra.mxu0 0
        %507 = vmatprep.subr.bf16.mxu0 0
        %508 = vmatpush1.bf16.msra.mxu0 0
        %509 = vmatprep.subr.bf16.mxu0 0
        %510 = vmatpush1.bf16.msra.mxu0 0
        %511 = vmatprep.subr.bf16.mxu0 0
        %512 = vmatpush1.bf16.msra.mxu0 0
        %513 = vmatprep.subr.bf16.mxu0 0
        %514 = vmatpush1.bf16.msra.mxu0 0
        %515 = vmatprep.subr.bf16.mxu0 0
        %516 = vmatpush1.bf16.msra.mxu0 0
        %517 = vmatprep.subr.bf16.mxu0 0
        %518 = vmatpush1.bf16.msra.mxu0 0
        %519 = vmatprep.mubr.bf16.mxu0 0
        %520 = vmatmul.mubr.bf16.gmra.mrb[0].mxu0 %v417
        %v521 = vpop.f32.mrb[0].mxu0
        %v522 = vadd.f32 0.0, %v521
        %v523 = vpop.f32.mrb[0].mxu0
        %v524 = vpop.f32.mrb[0].mxu0
        %v525 = vadd.f32 0.0, %v524
        %v526 = vpop.f32.mrb[0].mxu0
        %527 = vmatprep.mubr.bf16.mxu0 0
        %528 = vmatmul.mubr.bf16.gmra.mrb[0].mxu0 %v420
        %v529 = vpop.f32.mrb[0].mxu0
        %v530 = vadd.f32 0.0, %v529
        %v531 = vpop.f32.mrb[0].mxu0
        %v532 = vpop.f32.mrb[0].mxu0
        %v533 = vadd.f32 0.0, %v532
        %v534 = vpop.f32.mrb[0].mxu0
        %535 = vdwg.mxu0
        %v536 = vmul.f32 %v522, 0.0625
        %v537 = vmul.f32 %v525, 0.0625
        %v538 = vmul.f32 %v530, 0.0625
        %v539 = vmul.f32 %v533, 0.0625
        %v540 = vpack.c.bf16 %v537, %v536
        %v541 = vpack.c.bf16 %v539, %v538
        %v542 = vld [vmem:[#allocation10] sm:$0xf]
        %v543 = vld [vmem:[#allocation10 + $0x4] sm:$0xf]
        %v546 = vunpack.c.l.b16 %v542
        %v547 = vunpack.c.l.b16 %v543
        %v548 = vpack.c.b16 %v547, %v546
        %vm550 = vcmask 130048
        %v552 = vsel %vm550, %v540, 0
        %v555 = vsel %vm550, %v541, 0
        %557 = vmatprep.subr.bf16.mxu0 0
        %558 = vmatpush1.bf16.msra.mxu0 %v548
        %559 = vmatprep.subr.bf16.mxu0 0
        %560 = vmatpush1.bf16.msra.mxu0 0
        %561 = vmatprep.subr.bf16.mxu0 0
        %562 = vmatpush1.bf16.msra.mxu0 0
        %563 = vmatprep.subr.bf16.mxu0 0
        %564 = vmatpush1.bf16.msra.mxu0 0
        %565 = vmatprep.subr.bf16.mxu0 0
        %566 = vmatpush1.bf16.msra.mxu0 0
        %567 = vmatprep.subr.bf16.mxu0 0
        %568 = vmatpush1.bf16.msra.mxu0 0
        %569 = vmatprep.subr.bf16.mxu0 0
        %570 = vmatpush1.bf16.msra.mxu0 0
        %571 = vmatprep.subr.bf16.mxu0 0
        %572 = vmatpush1.bf16.msra.mxu0 0
        %573 = vmatprep.subr.bf16.mxu0 0
        %574 = vmatpush1.bf16.msra.mxu0 0
        %575 = vmatprep.subr.bf16.mxu0 0
        %576 = vmatpush1.bf16.msra.mxu0 0
        %577 = vmatprep.subr.bf16.mxu0 0
        %578 = vmatpush1.bf16.msra.mxu0 0
        %579 = vmatprep.subr.bf16.mxu0 0
        %580 = vmatpush1.bf16.msra.mxu0 0
        %581 = vmatprep.subr.bf16.mxu0 0
        %582 = vmatpush1.bf16.msra.mxu0 0
        %583 = vmatprep.subr.bf16.mxu0 0
        %584 = vmatpush1.bf16.msra.mxu0 0
        %585 = vmatprep.subr.bf16.mxu0 0
        %586 = vmatpush1.bf16.msra.mxu0 0
        %587 = vmatprep.subr.bf16.mxu0 0
        %588 = vmatpush1.bf16.msra.mxu0 0
        %589 = vmatprep.mubr.bf16.mxu0 0
        %590 = vmatmul.mubr.bf16.gmra.mrb[0].mxu0 %v552
        %v591 = vpop.f32.mrb[0].mxu0
        %v592 = vadd.f32 0.0, %v591
        %v593 = vpop.f32.mrb[0].mxu0
        %v594 = vpop.f32.mrb[0].mxu0
        %v595 = vadd.f32 0.0, %v594
        %v596 = vpop.f32.mrb[0].mxu0
        %597 = vmatprep.mubr.bf16.mxu0 0
        %598 = vmatmul.mubr.bf16.gmra.mrb[0].mxu0 %v555
        %v599 = vpop.f32.mrb[0].mxu0
        %v600 = vadd.f32 0.0, %v599
        %v601 = vpop.f32.mrb[0].mxu0
        %v602 = vpop.f32.mrb[0].mxu0
        %v603 = vadd.f32 0.0, %v602
        %v604 = vpop.f32.mrb[0].mxu0
        %605 = vdwg.mxu0
        %v606 = vsub.f32 %v457, %v592
        %v607 = vsub.f32 %v460, %v595
        %v608 = vsub.f32 %v465, %v600
        %v609 = vsub.f32 %v468, %v603
        %v610 = vpack.c.bf16 %v607, %v606
        %v611 = vpack.c.bf16 %v609, %v608
        %v612 = vmul.bf16 %v610, %v610
        %v613 = vmul.bf16 %v611, %v611
        %v614 = vld [vmem:[#allocation8] sm:$0xf]
        %v615 = vld [vmem:[#allocation8 + $0x4] sm:$0xf]
        %v616 = vld [vmem:[#allocation8 + $0x8] sm:$0xf]
        %v617 = vld [vmem:[#allocation8 + $0xc] sm:$0xf]
        %v618 = vld [vmem:[#allocation8 + $0x10] sm:$0xf]
        %v619 = vld [vmem:[#allocation8 + $0x14] sm:$0xf]
        %v620 = vld [vmem:[#allocation8 + $0x18] sm:$0xf]
        %v621 = vld [vmem:[#allocation8 + $0x1c] sm:$0xf]
        %v622 = vld [vmem:[#allocation8 + $0x20] sm:$0xf]
        %v623 = vld [vmem:[#allocation8 + $0x24] sm:$0xf]
        %v624 = vld [vmem:[#allocation8 + $0x28] sm:$0xf]
        %v625 = vld [vmem:[#allocation8 + $0x2c] sm:$0xf]
        %v626 = vld [vmem:[#allocation8 + $0x30] sm:$0xf]
        %v627 = vld [vmem:[#allocation8 + $0x34] sm:$0xf]
        %v628 = vld [vmem:[#allocation8 + $0x38] sm:$0xf]
        %v629 = vld [vmem:[#allocation8 + $0x3c] sm:$0xf]
        %v646 = vunpack.c.l.b16 %v614
        %v647 = vunpack.c.l.b16 %v615
        %v648 = vunpack.c.l.b16 %v616
        %v649 = vunpack.c.l.b16 %v617
        %v650 = vunpack.c.l.b16 %v618
        %v651 = vunpack.c.l.b16 %v619
        %v652 = vunpack.c.l.b16 %v620
        %v653 = vunpack.c.l.b16 %v621
        %v654 = vunpack.c.l.b16 %v622
        %v655 = vunpack.c.l.b16 %v623
        %v656 = vunpack.c.l.b16 %v624
        %v657 = vunpack.c.l.b16 %v625
        %v658 = vunpack.c.l.b16 %v626
        %v659 = vunpack.c.l.b16 %v627
        %v660 = vunpack.c.l.b16 %v628
        %v661 = vunpack.c.l.b16 %v629
        %v662 = vpack.c.b16 %v647, %v646
        %v663 = vpack.c.b16 %v649, %v648
        %v664 = vpack.c.b16 %v651, %v650
        %v665 = vpack.c.b16 %v653, %v652
        %v666 = vpack.c.b16 %v655, %v654
        %v667 = vpack.c.b16 %v657, %v656
        %v668 = vpack.c.b16 %v659, %v658
        %v669 = vpack.c.b16 %v661, %v660
        %678 = vmatprep.subr.bf16.mxu0 0
        %679 = vmatpush1.bf16.msra.mxu0 %v662
        %680 = vmatprep.subr.bf16.mxu0 0
        %681 = vmatpush1.bf16.msra.mxu0 %v663
        %682 = vmatprep.subr.bf16.mxu0 0
        %683 = vmatpush1.bf16.msra.mxu0 %v664
        %684 = vmatprep.subr.bf16.mxu0 0
        %685 = vmatpush1.bf16.msra.mxu0 %v665
        %686 = vmatprep.subr.bf16.mxu0 0
        %687 = vmatpush1.bf16.msra.mxu0 %v666
        %688 = vmatprep.subr.bf16.mxu0 0
        %689 = vmatpush1.bf16.msra.mxu0 %v667
        %690 = vmatprep.subr.bf16.mxu0 0
        %691 = vmatpush1.bf16.msra.mxu0 %v668
        %692 = vmatprep.subr.bf16.mxu0 0
        %693 = vmatpush1.bf16.msra.mxu0 %v669
        %694 = vmatprep.subr.bf16.mxu0 0
        %695 = vmatpush1.bf16.msra.mxu0 0
        %696 = vmatprep.subr.bf16.mxu0 0
        %697 = vmatpush1.bf16.msra.mxu0 0
        %698 = vmatprep.subr.bf16.mxu0 0
        %699 = vmatpush1.bf16.msra.mxu0 0
        %700 = vmatprep.subr.bf16.mxu0 0
        %701 = vmatpush1.bf16.msra.mxu0 0
        %702 = vmatprep.subr.bf16.mxu0 0
        %703 = vmatpush1.bf16.msra.mxu0 0
        %704 = vmatprep.subr.bf16.mxu0 0
        %705 = vmatpush1.bf16.msra.mxu0 0
        %706 = vmatprep.subr.bf16.mxu0 0
        %707 = vmatpush1.bf16.msra.mxu0 0
        %708 = vmatprep.subr.bf16.mxu0 0
        %709 = vmatpush1.bf16.msra.mxu0 0
        %710 = vmatprep.mubr.bf16.mxu0 0
        %711 = vmatmul.mubr.bf16.gmra.mrb[0].mxu0 %v612
        %v712 = vpop.f32.mrb[0].mxu0
        %v713 = vadd.f32 0.0, %v712
        %v714 = vpop.f32.mrb[0].mxu0
        %v715 = vpop.f32.mrb[0].mxu0
        %v716 = vadd.f32 0.0, %v715
        %v717 = vpop.f32.mrb[0].mxu0
        %718 = vmatprep.mubr.bf16.mxu0 0
        %719 = vmatmul.mubr.bf16.gmra.mrb[0].mxu0 %v613
        %v720 = vpop.f32.mrb[0].mxu0
        %v721 = vadd.f32 0.0, %v720
        %v722 = vpop.f32.mrb[0].mxu0
        %v723 = vpop.f32.mrb[0].mxu0
        %v724 = vadd.f32 0.0, %v723
        %v725 = vpop.f32.mrb[0].mxu0
        %726 = vdwg.mxu0
        %v727 = vmul.f32 %v713, 0.0625
        %v728 = vmul.f32 %v716, 0.0625
        %v729 = vmul.f32 %v721, 0.0625
        %v730 = vmul.f32 %v724, 0.0625
        %v731 = vadd.f32 %v727, 1e-05
        %v732 = vadd.f32 %v728, 1e-05
        %v733 = vadd.f32 %v729, 1e-05
        %v734 = vadd.f32 %v730, 1e-05
        %v735 = vrsqrt.pop %v731
        %v736 = vrsqrt.pop %v732
        %v737 = vrsqrt.pop %v733
        %v738 = vrsqrt.pop %v734
        %v739 = vpack.c.bf16 %v736, %v735
        %v740 = vpack.c.bf16 %v738, %v737
        %v741 = vld [vmem:[#allocation11] sm:$0xf]
        %v742 = vld [vmem:[#allocation11 + $0x4] sm:$0xf]
        %v745 = vunpack.c.l.b16 %v741
        %v746 = vunpack.c.l.b16 %v742
        %v747 = vpack.c.b16 %v746, %v745
        %v750 = vsel %vm550, %v739, 0
        %v753 = vsel %vm550, %v740, 0
        %755 = vmatprep.subr.bf16.mxu0 0
        %756 = vmatpush1.bf16.msra.mxu0 %v747
        %757 = vmatprep.subr.bf16.mxu0 0
        %758 = vmatpush1.bf16.msra.mxu0 0
        %759 = vmatprep.subr.bf16.mxu0 0
        %760 = vmatpush1.bf16.msra.mxu0 0
        %761 = vmatprep.subr.bf16.mxu0 0
        %762 = vmatpush1.bf16.msra.mxu0 0
        %763 = vmatprep.subr.bf16.mxu0 0
        %764 = vmatpush1.bf16.msra.mxu0 0
        %765 = vmatprep.subr.bf16.mxu0 0
        %766 = vmatpush1.bf16.msra.mxu0 0
        %767 = vmatprep.subr.bf16.mxu0 0
        %768 = vmatpush1.bf16.msra.mxu0 0
        %769 = vmatprep.subr.bf16.mxu0 0
        %770 = vmatpush1.bf16.msra.mxu0 0
        %771 = vmatprep.subr.bf16.mxu0 0
        %772 = vmatpush1.bf16.msra.mxu0 0
        %773 = vmatprep.subr.bf16.mxu0 0
        %774 = vmatpush1.bf16.msra.mxu0 0
        %775 = vmatprep.subr.bf16.mxu0 0
        %776 = vmatpush1.bf16.msra.mxu0 0
        %777 = vmatprep.subr.bf16.mxu0 0
        %778 = vmatpush1.bf16.msra.mxu0 0
        %779 = vmatprep.subr.bf16.mxu0 0
        %780 = vmatpush1.bf16.msra.mxu0 0
        %781 = vmatprep.subr.bf16.mxu0 0
        %782 = vmatpush1.bf16.msra.mxu0 0
        %783 = vmatprep.subr.bf16.mxu0 0
        %784 = vmatpush1.bf16.msra.mxu0 0
        %785 = vmatprep.subr.bf16.mxu0 0
        %786 = vmatpush1.bf16.msra.mxu0 0
        %787 = vmatprep.mubr.bf16.mxu0 0
        %788 = vmatmul.mubr.bf16.gmra.mrb[0].mxu0 %v750
        %v789 = vpop.f32.mrb[0].mxu0
        %v790 = vadd.f32 0.0, %v789
        %v791 = vpop.f32.mrb[0].mxu0
        %v792 = vpop.f32.mrb[0].mxu0
        %v793 = vadd.f32 0.0, %v792
        %v794 = vpop.f32.mrb[0].mxu0
        %795 = vmatprep.mubr.bf16.mxu0 0
        %796 = vmatmul.mubr.bf16.gmra.mrb[0].mxu0 %v753
        %v797 = vpop.f32.mrb[0].mxu0
        %v798 = vadd.f32 0.0, %v797
        %v799 = vpop.f32.mrb[0].mxu0
        %v800 = vpop.f32.mrb[0].mxu0
        %v801 = vadd.f32 0.0, %v800
        %v802 = vpop.f32.mrb[0].mxu0
        %803 = vdwg.mxu0
        %v804 = vmul.f32 %v606, %v790
        %v805 = vmul.f32 %v607, %v793
        %v806 = vmul.f32 %v608, %v798
        %v807 = vmul.f32 %v609, %v801
        %v808 = vld [vmem:[#allocation13] sm:$0x1]
        %v810 = vlaneseq
        %v811 = vshrl.u32 %v810, 7
        %v812 = vsub.s32 0, %v811
        %v813 = vrot.slane %v808, %v812
        %v815 = vadd.f32 %v804, %v813
        %v816 = vadd.f32 %v805, %v813
        %v817 = vadd.f32 %v806, %v813
        %v818 = vadd.f32 %v807, %v813
        %819 = vst [vmem:[%s381] sm:$0xff] %v815
        %820 = vst [vmem:[%s381 + $0x8] sm:$0xff] %v816
        %821 = vst [vmem:[%s381 + $0x10] sm:$0xff] %v817
        %822 = vst [vmem:[%s381 + $0x18] sm:$0xff] %v818
        %s823 = sand.u32 %s187, 1
        %s824 = scalar_lea.sflag [#allocation4], %s823
        %s825 = sand.u32 %s187, 1
        %s826 = smul.addr %s825, 32
        %s827 = scalar_lea.vmem [#allocation14], %s826
        // Predicated region
        $region77: #{tpu_custom_call.1} parent=47 // pred_check
          %p828 = pneg %p197
        $region78: #{tpu_custom_call.1} parent=47 // pred_check_branch
          %830 = sbr.rel (%p828) target = $region80
        $region79: #{tpu_custom_call.1} parent=47 // pred_region
          %s831 = smul.u32 4, %s27
          %s833 = ssub.s32 512, 512
          %834 = vsyncadd %s824, %s833
          %s835 = smul.addr %s831, 128
          %s836 = scalar_lea.hbm %s7, %s835
          %s837 = sshll.u32 %s827, 4
          %s838 = int_to_ptr.vmem [resolvable:$true] %s837
          %843 = dma.vmem_to_hbm [thread:$0]  %s838, 512, %s836, %s824, 128, 128, 8
        $region80: #{tpu_custom_call.1} parent=47 // pred_fallthru
          _
      $region48: #{tpu_custom_call.1} parent=5 // pred_fallthru
        _
      %p844 = scmp.le.s32.totalorder 2, %s22
      // Predicated region
      $region81: #{tpu_custom_call.1} parent=5 // pred_check
        %p845 = pneg %p844
      $region82: #{tpu_custom_call.1} parent=5 // pred_check_branch
        %847 = sbr.rel (%p845) target = $region84
      $region83: #{tpu_custom_call.1} parent=5 // pred_region
        %s848 = ssub.s32 %s22, 2
        // Predicated region
        $region85: #{tpu_custom_call.1} parent=83 // pred_check
          %p849 = pneg %p203
        $region86: #{tpu_custom_call.1} parent=83 // pred_check_branch
          %851 = sbr.rel (%p849) target = $region88
        $region87: #{tpu_custom_call.1} parent=83 // pred_region
          %s852 = sand.u32 %s188, 1
          %s853 = scalar_lea.sflag [#allocation4], %s852
          %s854 = sand.u32 %s188, 1
          %s855 = smul.addr %s854, 32
          %s856 = scalar_lea.vmem [#allocation14], %s855
          %857 = dma.done %s853, 512
        $region88: #{tpu_custom_call.1} parent=83 // pred_fallthru
          _
      $region84: #{tpu_custom_call.1} parent=5 // pred_fallthru
        _
    $region6: #{tpu_custom_call.1} parent=1 // loop_footer
      %s26 = sadd.s32 1, %s22
    $region7: #{tpu_custom_call.1} parent=1 // loop_footer_branch
      %21 = sbr.rel target = $region3
    $region8: #{tpu_custom_call.1} parent=1 // loop_exit
      _
    %858 = vsyncpa [#allocation3], 1
    %s859 = scalar_lea.sflag [#allocation3], 1
    %860 = vsyncpa %s859, 1
    %861 = vsyncpa [#allocation6], 1
    %862 = vsyncpa [#allocation9], 1
    %863 = vsyncpa [#allocation12], 1
    %864 = vsyncpa [#allocation4], 1
    %s865 = scalar_lea.sflag [#allocation4], 1
    %866 = vsyncpa %s865, 1

</llo_original>
